<compile_context>
chip_gen: v7x
topology: tpu7x:2x2x1
jax: 0.10.0
libtpu: 0.0.40
codegen_flags: <defaults>
</compile_context>

<pallas_src>
import functools

import jax
import jax.numpy as jnp
import numpy as np
from jax.experimental import pallas as pl
from jax.experimental.pallas import tpu as pltpu


# Double-buffered per-step working-set target (v7x-safe) and the scoped VMEM
# ceiling handed to Mosaic (above v5e's 16 MiB / v6e's 32 MiB defaults, below
# v7x's 64 MiB physical).
_WS_BUDGET_BYTES = 20 * 1024 * 1024
_VMEM_LIMIT_BYTES = 40 * 1024 * 1024


def _cdiv(a, b):
    return -(-a // b)


def _round_up(x, m):
    return ((x + m - 1) // m) * m


def rbf_logits_kernel(x_ref, xsq_ref, wt_ref, wsq_ref, out_ref, *,
                      scale, neg_inv_gamma):
    # x_ref  : (tile_b, D)  bf16      xsq_ref : (tile_b, 1)  f32
    # wt_ref : (D, tile_c)  bf16      wsq_ref : (1, tile_c)  f32
    # out_ref: (tile_b, tile_c)
    cross = jnp.dot(x_ref[...], wt_ref[...],
                    preferred_element_type=jnp.float32)        # MXU, (tb, tc)
    metric = xsq_ref[...] + wsq_ref[...] - 2.0 * cross          # broadcast adds
    metric = jnp.maximum(metric, 0.0)                           # cancellation guard
    out_ref[...] = (scale * jnp.exp(metric * neg_inv_gamma)).astype(out_ref.dtype)


def _working_set_bytes(tile_b, tile_c, D, in_bytes, out_bytes):
    # Double-buffered VMEM footprint of one grid step (incl. layout padding of
    # the tiny norm blocks to (8, 128) vreg tiles).
    feat = 2 * tile_b * D * in_bytes
    wgt = 2 * D * tile_c * in_bytes
    out = 2 * tile_b * tile_c * out_bytes
    xsq = 2 * tile_b * 128 * 4
    wsq = 2 * 8 * tile_c * 4
    return feat + wgt + out + xsq + wsq


def _choose_tiles(B, D, C, in_bytes, out_bytes):
    tb_cands = [t for t in (256, 128, 64, 32, 16, 8) if t <= _round_up(B, 8)]
    if not tb_cands:
        tb_cands = [8]
    c128 = _round_up(C, 128)
    tc_cands = [t for t in (1024, 512, 256, 128) if t <= c128]
    if not tc_cands:
        tc_cands = [128]

    # Largest lane-dense class tile first (dominant roofline lever), then the
    # largest batch tile that keeps the double-buffered working set in budget.
    tile_b, tile_c = tb_cands[-1], tc_cands[-1]
    done = False
    for tc in tc_cands:
        for tb in tb_cands:
            if _working_set_bytes(tb, tc, D, in_bytes, out_bytes) <= _WS_BUDGET_BYTES:
                tile_b, tile_c = tb, tc
                done = True
                break
        if done:
            break

    # Guarantee total grid >= 2 when the shapes allow it (megacore / v7x
    # 2-TC sharding); prefer splitting the class axis (stays lane-dense).
    grid_b = _cdiv(B, tile_b)
    grid_c = _cdiv(C, tile_c)
    while grid_b * grid_c < 2:
        if tile_c >= 256:
            tile_c //= 2
        elif tile_b >= 16:
            tile_b //= 2
        else:
            break
        grid_b = _cdiv(B, tile_b)
        grid_c = _cdiv(C, tile_c)
    return tile_b, tile_c


def rbf_logits(feat, weight=None, *, scale, gamma,
               w_t=None, w_sq=None, out_dtype=jnp.float32,
               tile_b=None, tile_c=None):
    """RBF logits: scale * exp(-||feat - weight||^2 / gamma), shape (B, C)."""
    B, D = feat.shape

    # Weight-side prep (transpose to lane-dense (D, C) bf16, f32 norms).
    # Prefer the cached versions supplied by the module.
    if w_t is None or w_sq is None:
        assert weight is not None
        w_f32 = weight.astype(jnp.float32)
        w_t = w_f32.T.astype(jnp.bfloat16)                      # (D, C)
        w_sq = jnp.sum(w_f32 * w_f32, axis=-1)[None, :]          # (1, C)
    C = w_t.shape[1]
    assert w_t.shape[0] == D and w_sq.shape == (1, C)

    # Norms in f32 (accuracy), cross-term operands in bf16 (MXU-native).
    feat_f32 = feat.astype(jnp.float32)
    x_sq = jnp.sum(feat_f32 * feat_f32, axis=-1, keepdims=True)  # (B, 1) f32
    feat_in = feat.astype(jnp.bfloat16)                          # no-op if bf16

    in_bytes = 2
    out_bytes = jnp.dtype(out_dtype).itemsize
    if tile_b is None or tile_c is None:
        tb, tc = _choose_tiles(B, D, C, in_bytes, out_bytes)
        tile_b = tile_b if tile_b is not None else tb
        tile_c = tile_c if tile_c is not None else tc

    grid_b = _cdiv(B, tile_b)
    grid_c = _cdiv(C, tile_c)
    B_total = grid_b * tile_b
    C_total = grid_c * tile_c

    # Pad to the tile grid (unmasked lane-dense stores, no degenerate grid).
    if B_total != B:
        feat_in = jnp.pad(feat_in, ((0, B_total - B), (0, 0)))
        x_sq = jnp.pad(x_sq, ((0, B_total - B), (0, 0)))
    if C_total != C:
        w_t = jnp.pad(w_t, ((0, 0), (0, C_total - C)))
        w_sq = jnp.pad(w_sq, ((0, 0), (0, C_total - C)))

    # Grid ordering: put the axis whose operand would otherwise be re-streamed
    # the most on the OUTER loop so Pallas fetches it only once.
    redundant_batch_outer = (grid_b - 1) * C_total * D   # extra weight traffic
    redundant_class_outer = (grid_c - 1) * B_total * D   # extra feat traffic
    class_outer = redundant_class_outer < redundant_batch_outer

    if class_outer:
        grid = (grid_c, grid_b)
        feat_map = lambda j, i: (i, 0)
        w_map = lambda j, i: (0, j)
        out_map = lambda j, i: (i, j)
        feat_factor, w_factor = grid_c, 1
    else:
        grid = (grid_b, grid_c)
        feat_map = lambda i, j: (i, 0)
        w_map = lambda i, j: (0, j)
        out_map = lambda i, j: (i, j)
        feat_factor, w_factor = 1, grid_b

    kernel = functools.partial(
        rbf_logits_kernel,
        scale=float(scale),
        neg_inv_gamma=-1.0 / float(gamma),
    )

    cost = pl.CostEstimate(
        flops=2 * B_total * C_total * D + 5 * B_total * C_total,
        transcendentals=B_total * C_total,
        bytes_accessed=(in_bytes * (B_total * D * feat_factor
                                    + C_total * D * w_factor)
                        + 4 * (B_total * feat_factor + C_total * w_factor)
                        + out_bytes * B_total * C_total),
    )

    out = pl.pallas_call(
        kernel,
        out_shape=jax.ShapeDtypeStruct((B_total, C_total), out_dtype),
        grid=grid,
        in_specs=[
            pl.BlockSpec((tile_b, D), feat_map),      # feat tile (bf16)
            pl.BlockSpec((tile_b, 1), feat_map),      # ||x||^2  (f32)
            pl.BlockSpec((D, tile_c), w_map),         # weight.T tile (bf16)
            pl.BlockSpec((1, tile_c), w_map),         # ||w||^2  (f32)
        ],
        out_specs=pl.BlockSpec((tile_b, tile_c), out_map),
        compiler_params=pltpu.CompilerParams(
            dimension_semantics=("parallel", "parallel"),
            vmem_limit_bytes=_VMEM_LIMIT_BYTES),
        cost_estimate=cost,
    )(feat_in, x_sq, w_t, w_sq)

    if B_total != B or C_total != C:
        out = out[:B, :C]
    return out


class RBFLogitsJax:
    """Parameter container mirroring the PyTorch module's __init__."""

    def __init__(self, feature_dim, class_num, scale, gamma, key):
        self.feature_dim = feature_dim
        self.class_num = class_num
        self.scale = scale
        self.gamma = gamma
        k_w, _ = jax.random.split(key)
        # xavier_uniform_ on weight [class_num, feature_dim]:
        # fan_in = feature_dim, fan_out = class_num
        bound = float(np.sqrt(6.0 / (feature_dim + class_num)))
        self.weight = jax.random.uniform(
            k_w, (class_num, feature_dim), dtype=jnp.float32,
            minval=-bound, maxval=bound)
        # bias exists as a parameter in the torch module but is unused in
        # forward; kept for shape parity.
        self.bias = jnp.zeros((class_num,), dtype=jnp.float32)
        self._refresh_weight_cache()

    def _refresh_weight_cache(self):
        """Recompute cached weight.T (bf16) and ||w||^2 (f32); call after any
        weight update so the per-forward wrapper does no C*D passes."""
        w_f32 = self.weight.astype(jnp.float32)
        self._w_t = w_f32.T.astype(jnp.bfloat16)                 # (D, C)
        self._w_sq = jnp.sum(w_f32 * w_f32, axis=-1)[None, :]     # (1, C)

    def __call__(self, feat, label):
        # label is unused by the forward math (same as the torch module).
        del label
        return rbf_logits(feat, scale=self.scale, gamma=self.gamma,
                          w_t=self._w_t, w_sq=self._w_sq)


def _reference(feat, weight, scale, gamma):
    diff = weight[None, :, :] - feat[:, None, :]
    metric = jnp.sum(diff * diff, axis=-1)
    return scale * jnp.exp(-metric / gamma)


if __name__ == "__main__":
    key = jax.random.PRNGKey(0)
    k_param, k_feat, k_label = jax.random.split(key, 3)

    batch = 8
    feature_dim = 32
    class_num = 256
    scale = 10.0
    gamma = 8.0

    module = RBFLogitsJax(feature_dim, class_num, scale, gamma, k_param)

    feat = jax.random.normal(k_feat, (batch, feature_dim), dtype=jnp.float32)
    label = jax.random.randint(k_label, (batch,), 0, class_num)

    logits = module(feat, label)
    logits = jax.block_until_ready(logits)

    ref = _reference(feat, module.weight, scale, gamma)
    # bf16 cross-term (f32 norms / f32 accumulation) -> slightly looser
    # tolerance than the pure-f32 path.
    np.testing.assert_allclose(np.asarray(logits), np.asarray(ref),
                               rtol=2e-2, atol=2e-3)
    print("KERNEL_OK")
</pallas_src>

<mosaic_0001>
module attributes {stable_mosaic.version = 11 : i64} {
  func.func @rbf_logits_kernel(%arg0: i32, %arg1: i32, %arg2: memref<8x32xbf16, #tpu.memory_space<vmem>>, %arg3: memref<8x1xf32, #tpu.memory_space<vmem>>, %arg4: memref<32x128xbf16, #tpu.memory_space<vmem>>, %arg5: memref<1x128xf32, #tpu.memory_space<vmem>>, %arg6: memref<8x128xf32, #tpu.memory_space<vmem>>) attributes {dimension_semantics = [#tpu.dimension_semantics<parallel>, #tpu.dimension_semantics<parallel>], iteration_bounds = array<i64: 1, 2>, scalar_prefetch = 0 : i64, scratch_operands = 0 : i64, tpu.core_type = #tpu.core_type<tc>, window_params = [{transform_indices = @transform_0, window_bounds = array<i64: 8, 32>}, {transform_indices = @transform_1, window_bounds = array<i64: 8, 1>}, {transform_indices = @transform_2, window_bounds = array<i64: 32, 128>}, {transform_indices = @transform_3, window_bounds = array<i64: 1, 128>}, {transform_indices = @transform_4, window_bounds = array<i64: 8, 128>}]} {
    %c0 = arith.constant 0 : index
    %c0_0 = arith.constant 0 : index
    %0 = vector.load %arg2[%c0, %c0_0] : memref<8x32xbf16, #tpu.memory_space<vmem>>, vector<8x32xbf16>
    %c0_1 = arith.constant 0 : index
    %c0_2 = arith.constant 0 : index
    %1 = vector.load %arg4[%c0_1, %c0_2] : memref<32x128xbf16, #tpu.memory_space<vmem>>, vector<32x128xbf16>
    %cst = arith.constant dense<0.000000e+00> : vector<8x128xf32>
    %2 = tpu.matmul %0, %1, %cst {dimension_numbers = #tpu.dot_dimension_numbers<[1], [0], [0], [1], [0, 0, 1, 1], [], []>} : vector<8x32xbf16>, vector<32x128xbf16>, vector<8x128xf32> -> vector<8x128xf32>
    %c0_3 = arith.constant 0 : index
    %c0_4 = arith.constant 0 : index
    %3 = vector.load %arg3[%c0_3, %c0_4] : memref<8x1xf32, #tpu.memory_space<vmem>>, vector<8x1xf32>
    %c0_5 = arith.constant 0 : index
    %c0_6 = arith.constant 0 : index
    %4 = vector.load %arg5[%c0_5, %c0_6] : memref<1x128xf32, #tpu.memory_space<vmem>>, vector<1x128xf32>
    %5 = vector.broadcast %3 : vector<8x1xf32> to vector<8x128xf32>
    %6 = vector.broadcast %4 : vector<1x128xf32> to vector<8x128xf32>
    %7 = arith.addf %5, %6 : vector<8x128xf32>
    %cst_7 = arith.constant 2.000000e+00 : f32
    %8 = vector.broadcast %cst_7 : f32 to vector<8x128xf32>
    %9 = arith.mulf %8, %2 : vector<8x128xf32>
    %10 = arith.subf %7, %9 : vector<8x128xf32>
    %cst_8 = arith.constant 0.000000e+00 : f32
    %11 = vector.broadcast %cst_8 : f32 to vector<8x128xf32>
    %12 = arith.maximumf %10, %11 : vector<8x128xf32>
    %cst_9 = arith.constant -1.250000e-01 : f32
    %13 = vector.broadcast %cst_9 : f32 to vector<8x128xf32>
    %14 = arith.mulf %12, %13 : vector<8x128xf32>
    %15 = math.exp %14 : vector<8x128xf32>
    %cst_10 = arith.constant 1.000000e+01 : f32
    %16 = vector.broadcast %cst_10 : f32 to vector<8x128xf32>
    %17 = arith.mulf %16, %15 : vector<8x128xf32>
    %c0_11 = arith.constant 0 : index
    %c0_12 = arith.constant 0 : index
    %18 = vector.load %arg6[%c0_11, %c0_12] : memref<8x128xf32, #tpu.memory_space<vmem>>, vector<8x128xf32>
    tpu.vector_store %arg6[%c0_11, %c0_12], %17 {strides = array<i32>} : memref<8x128xf32, #tpu.memory_space<vmem>>, vector<8x128xf32>,
    return
  }
  func.func @transform_0(%arg0: i32, %arg1: i32) -> (i32, i32) {
    %c0_i32 = arith.constant 0 : i32
    %c0_i32_0 = arith.constant 0 : i32
    return %arg0, %c0_i32 : i32, i32
  }
  func.func @transform_1(%arg0: i32, %arg1: i32) -> (i32, i32) {
    %c0_i32 = arith.constant 0 : i32
    %c0_i32_0 = arith.constant 0 : i32
    return %arg0, %c0_i32 : i32, i32
  }
  func.func @transform_2(%arg0: i32, %arg1: i32) -> (i32, i32) {
    %c0_i32 = arith.constant 0 : i32
    %c0_i32_0 = arith.constant 0 : i32
    return %c0_i32, %arg1 : i32, i32
  }
  func.func @transform_3(%arg0: i32, %arg1: i32) -> (i32, i32) {
    %c0_i32 = arith.constant 0 : i32
    %c0_i32_0 = arith.constant 0 : i32
    return %c0_i32, %arg1 : i32, i32
  }
  func.func @transform_4(%arg0: i32, %arg1: i32) -> (i32, i32) {
    %c0_i32 = arith.constant 0 : i32
    return %arg0, %arg1 : i32, i32
  }
}

</mosaic_0001>

<llo_original>
// kernel: tpu_custom_call.1
$region0: #{tpu_custom_call.1}
  #allocation0 [shape = 'u32[]', space=smem, size = 0x4, offset = 0x4, fixed_abs, tag = 'smem constant byte address 0x4 - core index']
  #allocation1 [shape = 'u32[144,128]{1,0:T(1,128)}', space=vmem, size = 0x12000, scoped, tag = 'internal scratch']
  %s0 = inlined_call_operand.vmem [shape: bf16[8,32], index: 0, kind: input, shape index: {}]
  %s1 = inlined_call_operand.vmem [shape: f32[8,1], index: 1, kind: input, shape index: {}]
  %s2 = inlined_call_operand.hbm [shape: bf16[32,256], index: 2, kind: input, shape index: {}]
  %s3 = inlined_call_operand.vmem [shape: f32[1,256], index: 3, kind: input, shape index: {}]
  %s4 = inlined_call_operand.hbm [shape: f32[8,256], index: 4, kind: output, shape index: {}]
  %s5 = sld [smem:[#allocation0]]
  $region53: #{tpu_custom_call.1} parent=0
    _
  %s7 = ssub.s32 1, %s5
  %s8 = scalar_select 0, %s7, %s5
  $region1: #{tpu_custom_call.1} parent=0
    #allocation2 [shape = 'u8[16384]{0}', space=vmem, size = 0x4000, scoped, tag = 'input window, operand 2']
    #allocation3 [shape = 's32[2]{0}', space=sflag, size = 0x8, scoped, tag = 'scoped memory for tpu_custom_call.1']
    #allocation4 [shape = 's32[2]{0}', space=sflag, size = 0x8, scoped, tag = 'scoped memory for tpu_custom_call.1']
    #allocation5 [shape = 'u8[8192]{0}', space=vmem, size = 0x2000, scoped, tag = 'output window, operand 0']
    %9 = vsyncpa [#allocation3], 0
    %s10 = scalar_lea.sflag [#allocation3], 1
    %11 = vsyncpa %s10, 0
    %12 = vsyncpa [#allocation4], 0
    %s13 = scalar_lea.sflag [#allocation4], 1
    %14 = vsyncpa %s13, 0
    loop: start=0, step=1, limit=4
    $region2: #{tpu_custom_call.1} parent=1 // loop_pre_header
      _
    $region3: #{tpu_custom_call.1} parent=1 // loop_header
      %s16 = sphi 0, %s20
      %p17 = scmp.ge.s32.totalorder %s16, 4
      %s23 = sphi 0, %s35
      %s24 = sphi 0, %s31
      %s25 = sphi 0, %s23
      %s26 = sphi 0, %s24
      %s27 = sphi 0, %s25
      %s28 = sphi 0, %s26
      %s38 = sphi 0, %s40
      %s41 = sphi 0, %s38
      %s42 = sphi 0, %s41
      %s58 = sphi 0, %s42
      %s64 = sphi 0, %s66
      %s67 = sphi 0, %s64
      %s68 = sphi 0, %s67
      %s84 = sphi 0, %s68
      %s90 = sphi 0, %s92
      %s93 = sphi 0, %s90
      %s94 = sphi 0, %s93
      %s110 = sphi 0, %s94
      %s116 = sphi 0, %s118
      %s119 = sphi 0, %s116
      %s120 = sphi 0, %s119
      %s136 = sphi 0, %s120
      %s144 = sphi 0, %s146
      %s147 = sphi 0, %s144
      %s148 = sphi 0, %s147
      %s164 = sphi 0, %s148
    $region4: #{tpu_custom_call.1} parent=1 // loop_header_branch
      %19 = sbr.rel (%p17) target = $region8
    $region5: #{tpu_custom_call.1} parent=1 // loop_body
      %s21 = ssub.s32 %s16, 1
      %s22 = ssub.s32 %s16, 2
      %s29 = sadd.s32 1, %s24
      %p30 = scmp.ge.s32.totalorder %s29, 2
      %s31 = scalar_select %p30, 0, %s29
      %s32 = sadd.s32 1, %s23
      %s33 = scalar_select %p30, %s32, %s23
      %p34 = scmp.ge.s32.totalorder %s33, 1
      %s35 = scalar_select %p34, 0, %s33
      %s36 = ssub.s32 %s23, %s35
      %p37 = scmp.eq.s32.totalorder %s36, 0
      %s39 = sadd.s32 %s38, 1
      %s40 = scalar_select %p37, %s38, %s39
      %p43 = pneg %p37
      %p44 = scmp.eq.s32.totalorder %s16, 1
      %p45 = por %p43, %p44
      %p46 = scmp.ne.s32.totalorder %s38, %s41
      %p47 = scmp.eq.s32.totalorder %s16, 0
      %p48 = por %p46, %p47
      %p49 = scmp.ne.s32.totalorder %s38, %s41
      %p50 = scmp.eq.s32.totalorder %s21, 1
      %p51 = por %p49, %p50
      %p52 = scmp.ne.s32.totalorder %s41, %s42
      %p53 = scmp.eq.s32.totalorder %s21, 0
      %p54 = por %p52, %p53
      %p55 = scmp.ne.s32.totalorder %s41, %s42
      %p56 = scmp.eq.s32.totalorder %s22, 1
      %p57 = por %p55, %p56
      %p59 = scmp.ne.s32.totalorder %s42, %s58
      %p60 = scmp.eq.s32.totalorder %s22, 0
      %p61 = por %p59, %p60
      %s62 = ssub.s32 %s23, %s35
      %p63 = scmp.eq.s32.totalorder %s62, 0
      %s65 = sadd.s32 %s64, 1
      %s66 = scalar_select %p63, %s64, %s65
      %p69 = pneg %p63
      %p70 = scmp.eq.s32.totalorder %s16, 1
      %p71 = por %p69, %p70
      %p72 = scmp.ne.s32.totalorder %s64, %s67
      %p73 = scmp.eq.s32.totalorder %s16, 0
      %p74 = por %p72, %p73
      %p75 = scmp.ne.s32.totalorder %s64, %s67
      %p76 = scmp.eq.s32.totalorder %s21, 1
      %p77 = por %p75, %p76
      %p78 = scmp.ne.s32.totalorder %s67, %s68
      %p79 = scmp.eq.s32.totalorder %s21, 0
      %p80 = por %p78, %p79
      %p81 = scmp.ne.s32.totalorder %s67, %s68
      %p82 = scmp.eq.s32.totalorder %s22, 1
      %p83 = por %p81, %p82
      %p85 = scmp.ne.s32.totalorder %s68, %s84
      %p86 = scmp.eq.s32.totalorder %s22, 0
      %p87 = por %p85, %p86
      %s88 = ssub.s32 %s24, %s31
      %p89 = scmp.eq.s32.totalorder %s88, 0
      %s91 = sadd.s32 %s90, 1
      %s92 = scalar_select %p89, %s90, %s91
      %p95 = pneg %p89
      %p96 = scmp.eq.s32.totalorder %s16, 1
      %p97 = por %p95, %p96
      %p98 = scmp.ne.s32.totalorder %s90, %s93
      %p99 = scmp.eq.s32.totalorder %s16, 0
      %p100 = por %p98, %p99
      %p101 = scmp.ne.s32.totalorder %s90, %s93
      %p102 = scmp.eq.s32.totalorder %s21, 1
      %p103 = por %p101, %p102
      %p104 = scmp.ne.s32.totalorder %s93, %s94
      %p105 = scmp.eq.s32.totalorder %s21, 0
      %p106 = por %p104, %p105
      %p107 = scmp.ne.s32.totalorder %s93, %s94
      %p108 = scmp.eq.s32.totalorder %s22, 1
      %p109 = por %p107, %p108
      %p111 = scmp.ne.s32.totalorder %s94, %s110
      %p112 = scmp.eq.s32.totalorder %s22, 0
      %p113 = por %p111, %p112
      %s114 = ssub.s32 %s24, %s31
      %p115 = scmp.eq.s32.totalorder %s114, 0
      %s117 = sadd.s32 %s116, 1
      %s118 = scalar_select %p115, %s116, %s117
      %p121 = pneg %p115
      %p122 = scmp.eq.s32.totalorder %s16, 1
      %p123 = por %p121, %p122
      %p124 = scmp.ne.s32.totalorder %s116, %s119
      %p125 = scmp.eq.s32.totalorder %s16, 0
      %p126 = por %p124, %p125
      %p127 = scmp.ne.s32.totalorder %s116, %s119
      %p128 = scmp.eq.s32.totalorder %s21, 1
      %p129 = por %p127, %p128
      %p130 = scmp.ne.s32.totalorder %s119, %s120
      %p131 = scmp.eq.s32.totalorder %s21, 0
      %p132 = por %p130, %p131
      %p133 = scmp.ne.s32.totalorder %s119, %s120
      %p134 = scmp.eq.s32.totalorder %s22, 1
      %p135 = por %p133, %p134
      %p137 = scmp.ne.s32.totalorder %s120, %s136
      %p138 = scmp.eq.s32.totalorder %s22, 0
      %p139 = por %p137, %p138
      %s140 = ssub.s32 %s23, %s35
      %s141 = ssub.s32 %s24, %s31
      %s142 = sor.u32 %s140, %s141
      %p143 = scmp.eq.s32.totalorder %s142, 0
      %s145 = sadd.s32 %s144, 1
      %s146 = scalar_select %p143, %s144, %s145
      %p149 = pneg %p143
      %p150 = scmp.eq.s32.totalorder %s16, 1
      %p151 = por %p149, %p150
      %p152 = scmp.ne.s32.totalorder %s144, %s147
      %p153 = scmp.eq.s32.totalorder %s16, 0
      %p154 = por %p152, %p153
      %p155 = scmp.ne.s32.totalorder %s144, %s147
      %p156 = scmp.eq.s32.totalorder %s21, 1
      %p157 = por %p155, %p156
      %p158 = scmp.ne.s32.totalorder %s147, %s148
      %p159 = scmp.eq.s32.totalorder %s21, 0
      %p160 = por %p158, %p159
      %p161 = scmp.ne.s32.totalorder %s147, %s148
      %p162 = scmp.eq.s32.totalorder %s22, 1
      %p163 = por %p161, %p162
      %p165 = scmp.ne.s32.totalorder %s148, %s164
      %p166 = scmp.eq.s32.totalorder %s22, 0
      %p167 = por %p165, %p166
      %p168 = scmp.le.s32.totalorder 1, %s16
      %p169 = scmp.lt.s32.totalorder %s16, 3
      %p170 = pnand %p168, %p169
      %p171 = pneg %p170
      // Predicated region
      $region9: #{tpu_custom_call.1} parent=5 // pred_check
        _
      $region10: #{tpu_custom_call.1} parent=5 // pred_check_branch
        %173 = sbr.rel (%p170) target = $region12
      $region11: #{tpu_custom_call.1} parent=5 // pred_region
        %s174 = ssub.s32 %s16, 1
        // Predicated region
        $region13: #{tpu_custom_call.1} parent=11 // pred_check
          %p175 = pneg %p54
        $region14: #{tpu_custom_call.1} parent=11 // pred_check_branch
          %177 = sbr.rel (%p175) target = $region16
        $region15: #{tpu_custom_call.1} parent=11 // pred_region
          %p178 = scmp.lt.s32.totalorder %s25, 0
          %s179 = scalar_select %p178, %s25, 0
          %s180 = smul.addr %s179, 4
          %s181 = scalar_lea.vmem %s0, %s180
        $region16: #{tpu_custom_call.1} parent=11 // pred_fallthru
          _
        // Predicated region
        $region17: #{tpu_custom_call.1} parent=11 // pred_check
          %p182 = pneg %p80
        $region18: #{tpu_custom_call.1} parent=11 // pred_check_branch
          %184 = sbr.rel (%p182) target = $region20
        $region19: #{tpu_custom_call.1} parent=11 // pred_region
          %p185 = scmp.lt.s32.totalorder %s25, 0
          %s186 = scalar_select %p185, %s25, 0
          %s187 = smul.addr %s186, 8
          %s188 = scalar_lea.vmem %s1, %s187
        $region20: #{tpu_custom_call.1} parent=11 // pred_fallthru
          _
      $region12: #{tpu_custom_call.1} parent=5 // pred_fallthru
        _
      %p189 = scmp.lt.s32.totalorder %s16, 2
      // Predicated region
      $region21: #{tpu_custom_call.1} parent=5 // pred_check
        %p190 = pneg %p189
      $region22: #{tpu_custom_call.1} parent=5 // pred_check_branch
        %192 = sbr.rel (%p190) target = $region24
      $region23: #{tpu_custom_call.1} parent=5 // pred_region
        // Predicated region
        $region25: #{tpu_custom_call.1} parent=23 // pred_check
          %p193 = pneg %p100
        $region26: #{tpu_custom_call.1} parent=23 // pred_check_branch
          %195 = sbr.rel (%p193) target = $region28
        $region27: #{tpu_custom_call.1} parent=23 // pred_region
          %s196 = sand.u32 %s90, 1
          %s197 = scalar_lea.sflag [#allocation3], %s196
          %s198 = sand.u32 %s90, 1
          %s199 = smul.addr %s198, 16
          %s200 = scalar_lea.vmem [#allocation2], %s199
          %s202 = ssub.s32 256, 256
          %203 = vsyncadd %s197, %s202
          %s204 = smul.addr %s24, 64
          %s205 = scalar_lea.hbm %s2, %s204
          %s206 = sshll.u32 %s200, 4
          %s207 = int_to_ptr.vmem [resolvable:$true] %s206
          %212 = dma.hbm_to_vmem [thread:$0]  %s205, 256, %s207, %s197, 128, 64, 4
        $region28: #{tpu_custom_call.1} parent=23 // pred_fallthru
          _
        // Predicated region
        $region29: #{tpu_custom_call.1} parent=23 // pred_check
          %p213 = pneg %p126
        $region30: #{tpu_custom_call.1} parent=23 // pred_check_branch
          %215 = sbr.rel (%p213) target = $region32
        $region31: #{tpu_custom_call.1} parent=23 // pred_region
          %p216 = scmp.lt.s32.totalorder %s24, 1
          %s217 = scalar_select %p216, %s24, 1
          %s218 = scalar_lea.vmem %s3, %s217
        $region32: #{tpu_custom_call.1} parent=23 // pred_fallthru
          _
      $region24: #{tpu_custom_call.1} parent=5 // pred_fallthru
        _
      %p219 = scmp.le.s32.totalorder 1, %s16
      %p220 = scmp.lt.s32.totalorder %s16, 3
      %p221 = pnand %p219, %p220
      %p222 = pneg %p221
      // Predicated region
      $region33: #{tpu_custom_call.1} parent=5 // pred_check
        _
      $region34: #{tpu_custom_call.1} parent=5 // pred_check_branch
        %224 = sbr.rel (%p221) target = $region36
      $region35: #{tpu_custom_call.1} parent=5 // pred_region
        %s225 = ssub.s32 %s16, 1
        %s226 = sand.u32 %s93, 1
        %s227 = scalar_lea.sflag [#allocation3], %s226
        %s228 = sand.u32 %s93, 1
        %s229 = smul.addr %s228, 16
        %s230 = scalar_lea.vmem [#allocation2], %s229
        // Predicated region
        $region37: #{tpu_custom_call.1} parent=35 // pred_check
          %p231 = pneg %p106
        $region38: #{tpu_custom_call.1} parent=35 // pred_check_branch
          %233 = sbr.rel (%p231) target = $region40
        $region39: #{tpu_custom_call.1} parent=35 // pred_region
          %234 = dma.done %s227, 256
        $region40: #{tpu_custom_call.1} parent=35 // pred_fallthru
          _
        %p235 = scmp.lt.s32.totalorder %s25, 0
        %s236 = scalar_select %p235, %s25, 0
        %s237 = smul.addr %s236, 4
        %s238 = scalar_lea.vmem %s0, %s237
        %p239 = pneg %p54
        %p240 = pneg %p51
        %p241 = scmp.lt.s32.totalorder %s25, 0
        %s242 = scalar_select %p241, %s25, 0
        %s243 = smul.addr %s242, 8
        %s244 = scalar_lea.vmem %s1, %s243
        %p245 = pneg %p80
        %p246 = pneg %p77
        %s247 = sand.u32 %s93, 1
        %s248 = scalar_lea.sflag [#allocation3], %s247
        %s249 = sand.u32 %s93, 1
        %s250 = smul.addr %s249, 16
        %s251 = scalar_lea.vmem [#allocation2], %s250
        %p252 = pneg %p106
        %p253 = pneg %p103
        %p254 = scmp.lt.s32.totalorder %s26, 1
        %s255 = scalar_select %p254, %s26, 1
        %s256 = scalar_lea.vmem %s3, %s255
        %p257 = pneg %p132
        %p258 = pneg %p129
        %p259 = pneg %p160
        %p260 = pneg %p157
        %s261 = sand.u32 %s147, 1
        %s262 = scalar_lea.sflag [#allocation4], %s261
        %s263 = sand.u32 %s147, 1
        %s264 = smul.addr %s263, 8
        %s265 = scalar_lea.vmem [#allocation5], %s264
        %p266 = scmp.lt.s32.totalorder %s25, 0
        %s267 = scalar_select %p266, %s25, 0
        %s268 = smul.addr %s267, 4
        %s269 = scalar_lea.vmem %s0, %s268
        %p270 = scmp.lt.s32.totalorder %s25, 0
        %s271 = scalar_select %p270, %s25, 0
        %s272 = smul.addr %s271, 8
        %s273 = scalar_lea.vmem %s1, %s272
        %p274 = scmp.lt.s32.totalorder %s26, 1
        %s275 = scalar_select %p274, %s26, 1
        %s276 = scalar_lea.vmem %s3, %s275
        %v278 = vld [vmem:[%s269] sm:$0xf]
        %v279 = vld [vmem:[%s230] sm:$0xf]
        %v280 = vld [vmem:[%s230 + $0x4] sm:$0xf]
        %v281 = vld [vmem:[%s230 + $0x8] sm:$0xf]
        %v282 = vld [vmem:[%s230 + $0xc] sm:$0xf]
        %v287 = vunpack.c.l.b16 %v279
        %v288 = vunpack.c.l.b16 %v280
        %v289 = vunpack.c.l.b16 %v281
        %v290 = vunpack.c.l.b16 %v282
        %v291 = vpack.c.b16 %v288, %v287
        %v292 = vpack.c.b16 %v290, %v289
        %vm295 = vcmask 261120
        %v297 = vsel %vm295, %v278, 0
        %299 = vmatprep.subr.bf16.mxu0 0
        %300 = vmatpush1.bf16.msra.mxu0 %v291
        %301 = vmatprep.subr.bf16.mxu0 0
        %302 = vmatpush1.bf16.msra.mxu0 %v292
        %303 = vmatprep.subr.bf16.mxu0 0
        %304 = vmatpush1.bf16.msra.mxu0 0
        %305 = vmatprep.subr.bf16.mxu0 0
        %306 = vmatpush1.bf16.msra.mxu0 0
        %307 = vmatprep.subr.bf16.mxu0 0
        %308 = vmatpush1.bf16.msra.mxu0 0
        %309 = vmatprep.subr.bf16.mxu0 0
        %310 = vmatpush1.bf16.msra.mxu0 0
        %311 = vmatprep.subr.bf16.mxu0 0
        %312 = vmatpush1.bf16.msra.mxu0 0
        %313 = vmatprep.subr.bf16.mxu0 0
        %314 = vmatpush1.bf16.msra.mxu0 0
        %315 = vmatprep.subr.bf16.mxu0 0
        %316 = vmatpush1.bf16.msra.mxu0 0
        %317 = vmatprep.subr.bf16.mxu0 0
        %318 = vmatpush1.bf16.msra.mxu0 0
        %319 = vmatprep.subr.bf16.mxu0 0
        %320 = vmatpush1.bf16.msra.mxu0 0
        %321 = vmatprep.subr.bf16.mxu0 0
        %322 = vmatpush1.bf16.msra.mxu0 0
        %323 = vmatprep.subr.bf16.mxu0 0
        %324 = vmatpush1.bf16.msra.mxu0 0
        %325 = vmatprep.subr.bf16.mxu0 0
        %326 = vmatpush1.bf16.msra.mxu0 0
        %327 = vmatprep.subr.bf16.mxu0 0
        %328 = vmatpush1.bf16.msra.mxu0 0
        %329 = vmatprep.subr.bf16.mxu0 0
        %330 = vmatpush1.bf16.msra.mxu0 0
        %331 = vmatprep.mubr.bf16.mxu0 0
        %332 = vmatmul.mubr.bf16.gmra.mrb[0].mxu0 %v297
        %v333 = vpop.f32.mrb[0].mxu0
        %v334 = vadd.f32 0.0, %v333
        %v335 = vpop.f32.mrb[0].mxu0
        %v336 = vpop.f32.mrb[0].mxu0
        %v337 = vpop.f32.mrb[0].mxu0
        %338 = vdwg.mxu0
        %v339 = vld [vmem:[%s273] sm:$0xff]
        %v340 = vld [vmem:[%s276] sm:$0x1]
        %342 = vset.pattern.permute.xlu0 0
        %343 = vperm.xlu0 %342, %v339
        %v344 = vpop.permute.xlu0 %343
        %v347 = vlaneseq
        %v348 = vshrl.u32 %v347, 7
        %v349 = vsub.s32 0, %v348
        %v350 = vrot.slane %v340, %v349
        %v352 = vadd.f32 %v344, %v350
        %v353 = vmul.f32 %v334, 2.0
        %v354 = vsub.f32 %v352, %v353
        %v355 = vmax.f32 %v354, 0.0
        %v356 = vmul.f32 %v355, -0.125
        %v357 = vmul.f32 %v356, 1.442695
        %v358 = vpow.pop %v357
        %v359 = vmul.f32 %v358, 10.0
        %360 = vst [vmem:[%s265] sm:$0xff] %v359
        %s361 = sand.u32 %s147, 1
        %s362 = scalar_lea.sflag [#allocation4], %s361
        %s363 = sand.u32 %s147, 1
        %s364 = smul.addr %s363, 8
        %s365 = scalar_lea.vmem [#allocation5], %s364
        // Predicated region
        $region41: #{tpu_custom_call.1} parent=35 // pred_check
          %p366 = pneg %p157
        $region42: #{tpu_custom_call.1} parent=35 // pred_check_branch
          %368 = sbr.rel (%p366) target = $region44
        $region43: #{tpu_custom_call.1} parent=35 // pred_region
          %s370 = ssub.s32 128, 128
          %371 = vsyncadd %s362, %s370
          %s372 = smul.addr %s25, 2
          %s373 = sadd.s32 %s26, %s372
          %s374 = smul.addr %s373, 128
          %s375 = scalar_lea.hbm %s4, %s374
          %s377 = sshll.u32 %s365, 4
          %s378 = int_to_ptr.vmem [resolvable:$true] %s377
          %380 = dma.vmem_to_hbm [thread:$0]  %s378, 128, %s375, %s362
        $region44: #{tpu_custom_call.1} parent=35 // pred_fallthru
          _
      $region36: #{tpu_custom_call.1} parent=5 // pred_fallthru
        _
      %p381 = scmp.le.s32.totalorder 2, %s16
      // Predicated region
      $region45: #{tpu_custom_call.1} parent=5 // pred_check
        %p382 = pneg %p381
      $region46: #{tpu_custom_call.1} parent=5 // pred_check_branch
        %384 = sbr.rel (%p382) target = $region48
      $region47: #{tpu_custom_call.1} parent=5 // pred_region
        %s385 = ssub.s32 %s16, 2
        // Predicated region
        $region49: #{tpu_custom_call.1} parent=47 // pred_check
          %p386 = pneg %p163
        $region50: #{tpu_custom_call.1} parent=47 // pred_check_branch
          %388 = sbr.rel (%p386) target = $region52
        $region51: #{tpu_custom_call.1} parent=47 // pred_region
          %s389 = sand.u32 %s148, 1
          %s390 = scalar_lea.sflag [#allocation4], %s389
          %s391 = sand.u32 %s148, 1
          %s392 = smul.addr %s391, 8
          %s393 = scalar_lea.vmem [#allocation5], %s392
          %394 = dma.done %s390, 128
        $region52: #{tpu_custom_call.1} parent=47 // pred_fallthru
          _
      $region48: #{tpu_custom_call.1} parent=5 // pred_fallthru
        _
    $region6: #{tpu_custom_call.1} parent=1 // loop_footer
      %s20 = sadd.s32 1, %s16
    $region7: #{tpu_custom_call.1} parent=1 // loop_footer_branch
      %15 = sbr.rel target = $region3
    $region8: #{tpu_custom_call.1} parent=1 // loop_exit
      _
    %395 = vsyncpa [#allocation3], 1
    %s396 = scalar_lea.sflag [#allocation3], 1
    %397 = vsyncpa %s396, 1
    %398 = vsyncpa [#allocation4], 1
    %s399 = scalar_lea.sflag [#allocation4], 1
    %400 = vsyncpa %s399, 1

</llo_original>
